<compile_context>
chip_gen: v6e
topology: v6e:2x2x1
jax: 0.10.0
libtpu: 0.0.40
codegen_flags: <defaults>
</compile_context>

<pallas_src>
import jax
import jax.numpy as jnp
from jax.experimental import pallas as pl
from jax.experimental.pallas import tpu as pltpu


def _make_sylvester_kernel(num_ortho_vecs, sum_ldj):
    M = num_ortho_vecs
    f32 = jnp.float32

    def kernel(zk_ref, q_ref, r1_ref, r2_ref, b_ref, z_ref, ldj_ref):
        # Layouts (Bt = batch block, on lanes):
        #   zk_ref : (Z, Bt)       zk_ref[z, b]    = zk[b, z]
        #   q_ref  : (M, Z, Bt)    q_ref[k, z, b]  = Q[b, z, k]
        #   r1_ref : (M, M, Bt)    r1_ref[j, k, b] = R1[b, k, j]
        #   r2_ref : (M, M, Bt)    r2_ref[k, j, b] = R2[b, j, k]
        #   b_ref  : (M, Bt)       b_ref[j, b]     = b[b, 0, j]
        zk = zk_ref[...].astype(f32)                           # (Z, Bt)

        # t1[j, b] = sum_k (sum_z zk[z,b] Q[b,z,k]) * R2[b,j,k] + b[b,j]
        t1 = b_ref[...].astype(f32)                            # (M, Bt)
        diag_r2_rows = []
        for k in range(M):
            qk = q_ref[k].astype(f32)                          # (Z, Bt) contiguous slab
            qz_k = jnp.sum(zk * qk, axis=0, keepdims=True)     # (1, Bt)
            r2k = r2_ref[k].astype(f32)                        # (M, Bt) = R2[b, :, k]
            t1 = t1 + qz_k * r2k                               # bcast over j sublanes
            diag_r2_rows.append(r2k[k:k + 1, :])               # R2[b, k, k]
        h = jnp.tanh(t1)                                       # (M, Bt)

        # t2[k, b] = sum_j R1[b, k, j] * h[j, b]
        t2 = jnp.zeros_like(t1)
        diag_r1_rows = []
        for j in range(M):
            r1j = r1_ref[j].astype(f32)                        # (M, Bt) = R1[b, :, j]
            t2 = t2 + h[j:j + 1, :] * r1j
            diag_r1_rows.append(r1j[j:j + 1, :])               # R1[b, j, j]

        # z'[z, b] = zk[z, b] + sum_k Q[b, z, k] * t2[k, b]
        z_acc = zk
        for k in range(M):
            z_acc = z_acc + q_ref[k].astype(f32) * t2[k:k + 1, :]
        z_ref[...] = z_acc.astype(z_ref.dtype)

        # log|diag J|_j = log|1 + (1 - h_j^2) * R1[b,j,j] * R2[b,j,j]|
        dd = (jnp.concatenate(diag_r1_rows, axis=0) *
              jnp.concatenate(diag_r2_rows, axis=0))           # (M, Bt)
        log_diag = jnp.log(jnp.abs((1.0 - h * h) * dd + 1.0))  # (M, Bt)
        if sum_ldj:
            ldj_ref[...] = jnp.sum(log_diag, axis=0, keepdims=True).astype(ldj_ref.dtype)
        else:
            ldj_ref[...] = log_diag.astype(ldj_ref.dtype)

    return kernel


def _pick_batch_block(batch, block_b):
    """Pick the batch tile Bt (lane dim) and grid length."""
    if batch <= 128:
        return batch, 1                      # single (possibly small) block
    block_b = max(128, (int(block_b) // 128) * 128)
    # Keep at least two grid steps so ("parallel",) can shard across the two
    # TensorCores on v7x; round the half-batch up to a full 128-lane group.
    half = ((batch + 1) // 2 + 127) // 128 * 128
    bt = min(block_b, half)
    nb = -(-batch // bt)                     # cdiv; last block may be ragged
    return bt, nb


def sylvester_forward_batch_last(zk_t, q_t, r1_t, r2_t, b_t, *,
                                 sum_ldj=True, block_b=2048):
    """Batch-last fast path (no relayouts).

    zk_t : (Z, B)      zk_t[z, b]    = zk[b, z]
    q_t  : (M, Z, B)   q_t[k, z, b]  = q_ortho[b, z, k]
    r1_t : (M, M, B)   r1_t[j, k, b] = r1[b, k, j]
    r2_t : (M, M, B)   r2_t[k, j, b] = r2[b, j, k]
    b_t  : (M, B)      b_t[j, b]     = b[b, 0, j]
    Returns z_t of shape (Z, B) and log_det of shape (1, B) (sum_ldj=True)
    or (M, B) (sum_ldj=False).
    """
    Z, B = zk_t.shape
    M = b_t.shape[0]
    f32 = jnp.float32

    Bt, nb = _pick_batch_block(B, block_b)

    # Scoped-VMEM budget: double-buffered in/out blocks plus headroom for
    # in-kernel temporaries (capped at 48 MiB for v7x's 64 MiB physical VMEM).
    bytes_per_sample = 4 * (Z + M * Z + 2 * M * M + M + Z + M)
    step_bytes = 2 * Bt * bytes_per_sample
    vmem_limit = int(min(max(3 * step_bytes, 32 << 20), 48 << 20))

    ldj_rows = 1 if sum_ldj else M
    kernel = _make_sylvester_kernel(M, sum_ldj)

    z_t, ldj_t = pl.pallas_call(
        kernel,
        out_shape=(
            jax.ShapeDtypeStruct((Z, B), f32),
            jax.ShapeDtypeStruct((ldj_rows, B), f32),
        ),
        grid_spec=pltpu.PrefetchScalarGridSpec(
            num_scalar_prefetch=0,
            grid=(nb,),
            in_specs=[
                pl.BlockSpec((Z, Bt), lambda i: (0, i)),          # zk (batch-last)
                pl.BlockSpec((M, Z, Bt), lambda i: (0, 0, i)),    # Q  (k leading)
                pl.BlockSpec((M, M, Bt), lambda i: (0, 0, i)),    # R1 (j leading)
                pl.BlockSpec((M, M, Bt), lambda i: (0, 0, i)),    # R2 (k leading)
                pl.BlockSpec((M, Bt), lambda i: (0, i)),          # b
            ],
            out_specs=[
                pl.BlockSpec((Z, Bt), lambda i: (0, i)),          # z' (lane-dense)
                pl.BlockSpec((ldj_rows, Bt), lambda i: (0, i)),   # log_det
            ],
        ),
        compiler_params=pltpu.CompilerParams(
            dimension_semantics=("parallel",),
            vmem_limit_bytes=vmem_limit),
    )(zk_t, q_t, r1_t, r2_t, b_t)
    return z_t, ldj_t


def sylvester_forward(zk, r1, r2, q_ortho, b, sum_ldj=True, block_b=2048):
    """Module-compatible wrapper (batch-first in, batch-first out).

    Does exactly one relayout copy per operand; prefer
    `sylvester_forward_batch_last` when the surrounding pipeline can produce
    Q/R1/R2 batch-last and consume z as (Z, B).
    """
    B, Z = zk.shape
    M = r1.shape[-1]
    f32 = jnp.float32
    # TODO(synk): optional bf16 input shipping (halves HBM traffic) is not
    # enabled by default; it loosens log_det tolerance when diag_j ~ 0.
    zk_t = zk.astype(f32).T                                    # (Z, B)
    q_t = jnp.transpose(q_ortho.astype(f32), (2, 1, 0))        # (M, Z, B)
    r1_t = jnp.transpose(r1.astype(f32), (2, 1, 0))            # (M, M, B)
    r2_t = jnp.transpose(r2.astype(f32), (2, 1, 0))            # (M, M, B)
    b_t = b.astype(f32).reshape(B, M).T                        # (M, B)

    z_t, ldj_t = sylvester_forward_batch_last(
        zk_t, q_t, r1_t, r2_t, b_t, sum_ldj=sum_ldj, block_b=block_b)

    z = z_t.T                                                  # (B, Z)
    log_det_j = ldj_t[0] if sum_ldj else ldj_t.T               # (B,) or (B, M)
    return z, log_det_j


def sylvester_reference(zk, r1, r2, q_ortho, b, sum_ldj=True):
    """Pure-JAX reference matching the PyTorch module."""
    qr2 = jnp.einsum('bzk,bjk->bzj', q_ortho, r2)              # Q @ R2^T
    qr1 = jnp.einsum('bzk,bkj->bzj', q_ortho, r1)              # Q @ R1
    r2qzb = jnp.einsum('bz,bzj->bj', zk, qr2) + b[:, 0, :]
    h = jnp.tanh(r2qzb)
    z = jnp.einsum('bj,bzj->bz', h, qr1) + zk
    diag_r1 = jnp.diagonal(r1, axis1=1, axis2=2)
    diag_r2 = jnp.diagonal(r2, axis1=1, axis2=2)
    diag_j = (1.0 - h ** 2) * diag_r1 * diag_r2 + 1.0
    log_diag_j = jnp.log(jnp.abs(diag_j))
    return z, (jnp.sum(log_diag_j, axis=-1) if sum_ldj else log_diag_j)


def _make_inputs(key, B, Z, M):
    k1, k2, k3, k4, k5 = jax.random.split(key, 5)
    zk = jax.random.normal(k1, (B, Z), dtype=jnp.float32)
    triu = jnp.triu(jnp.ones((M, M), jnp.float32))
    r1 = jax.random.normal(k2, (B, M, M), dtype=jnp.float32) * triu[None]
    r2 = jax.random.normal(k3, (B, M, M), dtype=jnp.float32) * triu[None]
    q_raw = jax.random.normal(k4, (B, Z, M), dtype=jnp.float32)
    q_ortho, _ = jnp.linalg.qr(q_raw)
    bb = jax.random.normal(k5, (B, 1, M), dtype=jnp.float32)
    return zk, r1, r2, q_ortho, bb


if __name__ == "__main__":
    Z, M = 32, 8            # z_size, num_ortho_vecs
    root = jax.random.PRNGKey(0)
    key_small, key_big = jax.random.split(root)

    # Small demo shape: single batch block, Bt == B.
    B = 2
    zk, r1, r2, q_ortho, bb = _make_inputs(key_small, B, Z, M)
    z, ldj = sylvester_forward(zk, r1, r2, q_ortho, bb, sum_ldj=True)
    jax.block_until_ready((z, ldj))
    z_ref, ldj_ref = sylvester_reference(zk, r1, r2, q_ortho, bb, sum_ldj=True)
    assert jnp.allclose(z, z_ref, atol=1e-4, rtol=1e-4), "z mismatch (small)"
    assert jnp.allclose(ldj, ldj_ref, atol=1e-4, rtol=1e-4), "log_det_j mismatch (small)"

    # sum_ldj=False path (per-dimension log_diag_j).
    z_n, ldj_n = sylvester_forward(zk, r1, r2, q_ortho, bb, sum_ldj=False)
    jax.block_until_ready((z_n, ldj_n))
    z_nr, ldj_nr = sylvester_reference(zk, r1, r2, q_ortho, bb, sum_ldj=False)
    assert jnp.allclose(z_n, z_nr, atol=1e-4, rtol=1e-4), "z mismatch (no-sum)"
    assert jnp.allclose(ldj_n, ldj_nr, atol=1e-4, rtol=1e-4), "log_diag_j mismatch (no-sum)"

    # Batched path: >= 2 grid steps with a ragged last block (no padding copy).
    B2 = 260
    zk2, r12, r22, q2, bb2 = _make_inputs(key_big, B2, Z, M)
    z2, ldj2 = sylvester_forward(zk2, r12, r22, q2, bb2, sum_ldj=True)
    jax.block_until_ready((z2, ldj2))
    z2_ref, ldj2_ref = sylvester_reference(zk2, r12, r22, q2, bb2, sum_ldj=True)
    assert jnp.allclose(z2, z2_ref, atol=1e-4, rtol=1e-4), "z mismatch (blocked)"
    assert jnp.allclose(ldj2, ldj2_ref, atol=1e-4, rtol=1e-4), "log_det_j mismatch (blocked)"

    print("KERNEL_OK")
</pallas_src>

<mosaic_0001>
module attributes {stable_mosaic.version = 11 : i64} {
  func.func @kernel(%arg0: i32, %arg1: memref<32x2xf32, #tpu.memory_space<vmem>>, %arg2: memref<8x32x2xf32, #tpu.memory_space<vmem>>, %arg3: memref<8x8x2xf32, #tpu.memory_space<vmem>>, %arg4: memref<8x8x2xf32, #tpu.memory_space<vmem>>, %arg5: memref<8x2xf32, #tpu.memory_space<vmem>>, %arg6: memref<32x2xf32, #tpu.memory_space<vmem>>, %arg7: memref<1x2xf32, #tpu.memory_space<vmem>>) attributes {dimension_semantics = [#tpu.dimension_semantics<parallel>], iteration_bounds = array<i64: 1>, scalar_prefetch = 0 : i64, scratch_operands = 0 : i64, tpu.core_type = #tpu.core_type<tc>, window_params = [{transform_indices = @transform_0, window_bounds = array<i64: 32, 2>}, {transform_indices = @transform_1, window_bounds = array<i64: 8, 32, 2>}, {transform_indices = @transform_2, window_bounds = array<i64: 8, 8, 2>}, {transform_indices = @transform_3, window_bounds = array<i64: 8, 8, 2>}, {transform_indices = @transform_4, window_bounds = array<i64: 8, 2>}, {transform_indices = @transform_5, window_bounds = array<i64: 32, 2>}, {transform_indices = @transform_6, window_bounds = array<i64: 1, 2>}]} {
    %c0 = arith.constant 0 : index
    %c0_0 = arith.constant 0 : index
    %0 = vector.load %arg1[%c0, %c0_0] : memref<32x2xf32, #tpu.memory_space<vmem>>, vector<32x2xf32>
    %c0_1 = arith.constant 0 : index
    %c0_2 = arith.constant 0 : index
    %1 = vector.load %arg5[%c0_1, %c0_2] : memref<8x2xf32, #tpu.memory_space<vmem>>, vector<8x2xf32>
    %c0_3 = arith.constant 0 : index
    %c0_4 = arith.constant 0 : index
    %c0_5 = arith.constant 0 : index
    %2 = vector.load %arg2[%c0_3, %c0_4, %c0_5] : memref<8x32x2xf32, #tpu.memory_space<vmem>>, vector<1x32x2xf32>
    %3 = vector.shape_cast %2 : vector<1x32x2xf32> to vector<32x2xf32>
    %4 = arith.mulf %0, %3 : vector<32x2xf32>
    %cst = arith.constant dense<0.000000e+00> : vector<2xf32>
    %5 = vector.multi_reduction <add>, %4, %cst [0] : vector<32x2xf32> to vector<2xf32>
    %6 = vector.shape_cast %5 : vector<2xf32> to vector<1x2xf32>
    %c0_6 = arith.constant 0 : index
    %c0_7 = arith.constant 0 : index
    %c0_8 = arith.constant 0 : index
    %7 = vector.load %arg4[%c0_6, %c0_7, %c0_8] : memref<8x8x2xf32, #tpu.memory_space<vmem>>, vector<1x8x2xf32>
    %8 = vector.shape_cast %7 : vector<1x8x2xf32> to vector<8x2xf32>
    %9 = vector.broadcast %6 : vector<1x2xf32> to vector<8x2xf32>
    %10 = arith.mulf %9, %8 : vector<8x2xf32>
    %11 = arith.addf %1, %10 : vector<8x2xf32>
    %12 = vector.extract_strided_slice %8 {offsets = [0, 0], sizes = [1, 2], strides = [1, 1]} : vector<8x2xf32> to vector<1x2xf32>
    %c1 = arith.constant 1 : index
    %c0_9 = arith.constant 0 : index
    %c0_10 = arith.constant 0 : index
    %13 = vector.load %arg2[%c1, %c0_9, %c0_10] : memref<8x32x2xf32, #tpu.memory_space<vmem>>, vector<1x32x2xf32>
    %14 = vector.shape_cast %13 : vector<1x32x2xf32> to vector<32x2xf32>
    %15 = arith.mulf %0, %14 : vector<32x2xf32>
    %cst_11 = arith.constant dense<0.000000e+00> : vector<2xf32>
    %16 = vector.multi_reduction <add>, %15, %cst_11 [0] : vector<32x2xf32> to vector<2xf32>
    %17 = vector.shape_cast %16 : vector<2xf32> to vector<1x2xf32>
    %c1_12 = arith.constant 1 : index
    %c0_13 = arith.constant 0 : index
    %c0_14 = arith.constant 0 : index
    %18 = vector.load %arg4[%c1_12, %c0_13, %c0_14] : memref<8x8x2xf32, #tpu.memory_space<vmem>>, vector<1x8x2xf32>
    %19 = vector.shape_cast %18 : vector<1x8x2xf32> to vector<8x2xf32>
    %20 = vector.broadcast %17 : vector<1x2xf32> to vector<8x2xf32>
    %21 = arith.mulf %20, %19 : vector<8x2xf32>
    %22 = arith.addf %11, %21 : vector<8x2xf32>
    %23 = vector.extract_strided_slice %19 {offsets = [1, 0], sizes = [1, 2], strides = [1, 1]} : vector<8x2xf32> to vector<1x2xf32>
    %c2 = arith.constant 2 : index
    %c0_15 = arith.constant 0 : index
    %c0_16 = arith.constant 0 : index
    %24 = vector.load %arg2[%c2, %c0_15, %c0_16] : memref<8x32x2xf32, #tpu.memory_space<vmem>>, vector<1x32x2xf32>
    %25 = vector.shape_cast %24 : vector<1x32x2xf32> to vector<32x2xf32>
    %26 = arith.mulf %0, %25 : vector<32x2xf32>
    %cst_17 = arith.constant dense<0.000000e+00> : vector<2xf32>
    %27 = vector.multi_reduction <add>, %26, %cst_17 [0] : vector<32x2xf32> to vector<2xf32>
    %28 = vector.shape_cast %27 : vector<2xf32> to vector<1x2xf32>
    %c2_18 = arith.constant 2 : index
    %c0_19 = arith.constant 0 : index
    %c0_20 = arith.constant 0 : index
    %29 = vector.load %arg4[%c2_18, %c0_19, %c0_20] : memref<8x8x2xf32, #tpu.memory_space<vmem>>, vector<1x8x2xf32>
    %30 = vector.shape_cast %29 : vector<1x8x2xf32> to vector<8x2xf32>
    %31 = vector.broadcast %28 : vector<1x2xf32> to vector<8x2xf32>
    %32 = arith.mulf %31, %30 : vector<8x2xf32>
    %33 = arith.addf %22, %32 : vector<8x2xf32>
    %34 = vector.extract_strided_slice %30 {offsets = [2, 0], sizes = [1, 2], strides = [1, 1]} : vector<8x2xf32> to vector<1x2xf32>
    %c3 = arith.constant 3 : index
    %c0_21 = arith.constant 0 : index
    %c0_22 = arith.constant 0 : index
    %35 = vector.load %arg2[%c3, %c0_21, %c0_22] : memref<8x32x2xf32, #tpu.memory_space<vmem>>, vector<1x32x2xf32>
    %36 = vector.shape_cast %35 : vector<1x32x2xf32> to vector<32x2xf32>
    %37 = arith.mulf %0, %36 : vector<32x2xf32>
    %cst_23 = arith.constant dense<0.000000e+00> : vector<2xf32>
    %38 = vector.multi_reduction <add>, %37, %cst_23 [0] : vector<32x2xf32> to vector<2xf32>
    %39 = vector.shape_cast %38 : vector<2xf32> to vector<1x2xf32>
    %c3_24 = arith.constant 3 : index
    %c0_25 = arith.constant 0 : index
    %c0_26 = arith.constant 0 : index
    %40 = vector.load %arg4[%c3_24, %c0_25, %c0_26] : memref<8x8x2xf32, #tpu.memory_space<vmem>>, vector<1x8x2xf32>
    %41 = vector.shape_cast %40 : vector<1x8x2xf32> to vector<8x2xf32>
    %42 = vector.broadcast %39 : vector<1x2xf32> to vector<8x2xf32>
    %43 = arith.mulf %42, %41 : vector<8x2xf32>
    %44 = arith.addf %33, %43 : vector<8x2xf32>
    %45 = vector.extract_strided_slice %41 {offsets = [3, 0], sizes = [1, 2], strides = [1, 1]} : vector<8x2xf32> to vector<1x2xf32>
    %c4 = arith.constant 4 : index
    %c0_27 = arith.constant 0 : index
    %c0_28 = arith.constant 0 : index
    %46 = vector.load %arg2[%c4, %c0_27, %c0_28] : memref<8x32x2xf32, #tpu.memory_space<vmem>>, vector<1x32x2xf32>
    %47 = vector.shape_cast %46 : vector<1x32x2xf32> to vector<32x2xf32>
    %48 = arith.mulf %0, %47 : vector<32x2xf32>
    %cst_29 = arith.constant dense<0.000000e+00> : vector<2xf32>
    %49 = vector.multi_reduction <add>, %48, %cst_29 [0] : vector<32x2xf32> to vector<2xf32>
    %50 = vector.shape_cast %49 : vector<2xf32> to vector<1x2xf32>
    %c4_30 = arith.constant 4 : index
    %c0_31 = arith.constant 0 : index
    %c0_32 = arith.constant 0 : index
    %51 = vector.load %arg4[%c4_30, %c0_31, %c0_32] : memref<8x8x2xf32, #tpu.memory_space<vmem>>, vector<1x8x2xf32>
    %52 = vector.shape_cast %51 : vector<1x8x2xf32> to vector<8x2xf32>
    %53 = vector.broadcast %50 : vector<1x2xf32> to vector<8x2xf32>
    %54 = arith.mulf %53, %52 : vector<8x2xf32>
    %55 = arith.addf %44, %54 : vector<8x2xf32>
    %56 = vector.extract_strided_slice %52 {offsets = [4, 0], sizes = [1, 2], strides = [1, 1]} : vector<8x2xf32> to vector<1x2xf32>
    %c5 = arith.constant 5 : index
    %c0_33 = arith.constant 0 : index
    %c0_34 = arith.constant 0 : index
    %57 = vector.load %arg2[%c5, %c0_33, %c0_34] : memref<8x32x2xf32, #tpu.memory_space<vmem>>, vector<1x32x2xf32>
    %58 = vector.shape_cast %57 : vector<1x32x2xf32> to vector<32x2xf32>
    %59 = arith.mulf %0, %58 : vector<32x2xf32>
    %cst_35 = arith.constant dense<0.000000e+00> : vector<2xf32>
    %60 = vector.multi_reduction <add>, %59, %cst_35 [0] : vector<32x2xf32> to vector<2xf32>
    %61 = vector.shape_cast %60 : vector<2xf32> to vector<1x2xf32>
    %c5_36 = arith.constant 5 : index
    %c0_37 = arith.constant 0 : index
    %c0_38 = arith.constant 0 : index
    %62 = vector.load %arg4[%c5_36, %c0_37, %c0_38] : memref<8x8x2xf32, #tpu.memory_space<vmem>>, vector<1x8x2xf32>
    %63 = vector.shape_cast %62 : vector<1x8x2xf32> to vector<8x2xf32>
    %64 = vector.broadcast %61 : vector<1x2xf32> to vector<8x2xf32>
    %65 = arith.mulf %64, %63 : vector<8x2xf32>
    %66 = arith.addf %55, %65 : vector<8x2xf32>
    %67 = vector.extract_strided_slice %63 {offsets = [5, 0], sizes = [1, 2], strides = [1, 1]} : vector<8x2xf32> to vector<1x2xf32>
    %c6 = arith.constant 6 : index
    %c0_39 = arith.constant 0 : index
    %c0_40 = arith.constant 0 : index
    %68 = vector.load %arg2[%c6, %c0_39, %c0_40] : memref<8x32x2xf32, #tpu.memory_space<vmem>>, vector<1x32x2xf32>
    %69 = vector.shape_cast %68 : vector<1x32x2xf32> to vector<32x2xf32>
    %70 = arith.mulf %0, %69 : vector<32x2xf32>
    %cst_41 = arith.constant dense<0.000000e+00> : vector<2xf32>
    %71 = vector.multi_reduction <add>, %70, %cst_41 [0] : vector<32x2xf32> to vector<2xf32>
    %72 = vector.shape_cast %71 : vector<2xf32> to vector<1x2xf32>
    %c6_42 = arith.constant 6 : index
    %c0_43 = arith.constant 0 : index
    %c0_44 = arith.constant 0 : index
    %73 = vector.load %arg4[%c6_42, %c0_43, %c0_44] : memref<8x8x2xf32, #tpu.memory_space<vmem>>, vector<1x8x2xf32>
    %74 = vector.shape_cast %73 : vector<1x8x2xf32> to vector<8x2xf32>
    %75 = vector.broadcast %72 : vector<1x2xf32> to vector<8x2xf32>
    %76 = arith.mulf %75, %74 : vector<8x2xf32>
    %77 = arith.addf %66, %76 : vector<8x2xf32>
    %78 = vector.extract_strided_slice %74 {offsets = [6, 0], sizes = [1, 2], strides = [1, 1]} : vector<8x2xf32> to vector<1x2xf32>
    %c7 = arith.constant 7 : index
    %c0_45 = arith.constant 0 : index
    %c0_46 = arith.constant 0 : index
    %79 = vector.load %arg2[%c7, %c0_45, %c0_46] : memref<8x32x2xf32, #tpu.memory_space<vmem>>, vector<1x32x2xf32>
    %80 = vector.shape_cast %79 : vector<1x32x2xf32> to vector<32x2xf32>
    %81 = arith.mulf %0, %80 : vector<32x2xf32>
    %cst_47 = arith.constant dense<0.000000e+00> : vector<2xf32>
    %82 = vector.multi_reduction <add>, %81, %cst_47 [0] : vector<32x2xf32> to vector<2xf32>
    %83 = vector.shape_cast %82 : vector<2xf32> to vector<1x2xf32>
    %c7_48 = arith.constant 7 : index
    %c0_49 = arith.constant 0 : index
    %c0_50 = arith.constant 0 : index
    %84 = vector.load %arg4[%c7_48, %c0_49, %c0_50] : memref<8x8x2xf32, #tpu.memory_space<vmem>>, vector<1x8x2xf32>
    %85 = vector.shape_cast %84 : vector<1x8x2xf32> to vector<8x2xf32>
    %86 = vector.broadcast %83 : vector<1x2xf32> to vector<8x2xf32>
    %87 = arith.mulf %86, %85 : vector<8x2xf32>
    %88 = arith.addf %77, %87 : vector<8x2xf32>
    %89 = vector.extract_strided_slice %85 {offsets = [7, 0], sizes = [1, 2], strides = [1, 1]} : vector<8x2xf32> to vector<1x2xf32>
    %90 = math.tanh %88 : vector<8x2xf32>
    %cst_51 = arith.constant 0.000000e+00 : f32
    %91 = vector.broadcast %cst_51 : f32 to vector<8x2xf32>
    %c0_52 = arith.constant 0 : index
    %c0_53 = arith.constant 0 : index
    %c0_54 = arith.constant 0 : index
    %92 = vector.load %arg3[%c0_52, %c0_53, %c0_54] : memref<8x8x2xf32, #tpu.memory_space<vmem>>, vector<1x8x2xf32>
    %93 = vector.shape_cast %92 : vector<1x8x2xf32> to vector<8x2xf32>
    %94 = vector.extract_strided_slice %90 {offsets = [0, 0], sizes = [1, 2], strides = [1, 1]} : vector<8x2xf32> to vector<1x2xf32>
    %95 = vector.broadcast %94 : vector<1x2xf32> to vector<8x2xf32>
    %96 = arith.mulf %95, %93 : vector<8x2xf32>
    %97 = arith.addf %91, %96 : vector<8x2xf32>
    %98 = vector.extract_strided_slice %93 {offsets = [0, 0], sizes = [1, 2], strides = [1, 1]} : vector<8x2xf32> to vector<1x2xf32>
    %c1_55 = arith.constant 1 : index
    %c0_56 = arith.constant 0 : index
    %c0_57 = arith.constant 0 : index
    %99 = vector.load %arg3[%c1_55, %c0_56, %c0_57] : memref<8x8x2xf32, #tpu.memory_space<vmem>>, vector<1x8x2xf32>
    %100 = vector.shape_cast %99 : vector<1x8x2xf32> to vector<8x2xf32>
    %101 = vector.extract_strided_slice %90 {offsets = [1, 0], sizes = [1, 2], strides = [1, 1]} : vector<8x2xf32> to vector<1x2xf32>
    %102 = vector.broadcast %101 : vector<1x2xf32> to vector<8x2xf32>
    %103 = arith.mulf %102, %100 : vector<8x2xf32>
    %104 = arith.addf %97, %103 : vector<8x2xf32>
    %105 = vector.extract_strided_slice %100 {offsets = [1, 0], sizes = [1, 2], strides = [1, 1]} : vector<8x2xf32> to vector<1x2xf32>
    %c2_58 = arith.constant 2 : index
    %c0_59 = arith.constant 0 : index
    %c0_60 = arith.constant 0 : index
    %106 = vector.load %arg3[%c2_58, %c0_59, %c0_60] : memref<8x8x2xf32, #tpu.memory_space<vmem>>, vector<1x8x2xf32>
    %107 = vector.shape_cast %106 : vector<1x8x2xf32> to vector<8x2xf32>
    %108 = vector.extract_strided_slice %90 {offsets = [2, 0], sizes = [1, 2], strides = [1, 1]} : vector<8x2xf32> to vector<1x2xf32>
    %109 = vector.broadcast %108 : vector<1x2xf32> to vector<8x2xf32>
    %110 = arith.mulf %109, %107 : vector<8x2xf32>
    %111 = arith.addf %104, %110 : vector<8x2xf32>
    %112 = vector.extract_strided_slice %107 {offsets = [2, 0], sizes = [1, 2], strides = [1, 1]} : vector<8x2xf32> to vector<1x2xf32>
    %c3_61 = arith.constant 3 : index
    %c0_62 = arith.constant 0 : index
    %c0_63 = arith.constant 0 : index
    %113 = vector.load %arg3[%c3_61, %c0_62, %c0_63] : memref<8x8x2xf32, #tpu.memory_space<vmem>>, vector<1x8x2xf32>
    %114 = vector.shape_cast %113 : vector<1x8x2xf32> to vector<8x2xf32>
    %115 = vector.extract_strided_slice %90 {offsets = [3, 0], sizes = [1, 2], strides = [1, 1]} : vector<8x2xf32> to vector<1x2xf32>
    %116 = vector.broadcast %115 : vector<1x2xf32> to vector<8x2xf32>
    %117 = arith.mulf %116, %114 : vector<8x2xf32>
    %118 = arith.addf %111, %117 : vector<8x2xf32>
    %119 = vector.extract_strided_slice %114 {offsets = [3, 0], sizes = [1, 2], strides = [1, 1]} : vector<8x2xf32> to vector<1x2xf32>
    %c4_64 = arith.constant 4 : index
    %c0_65 = arith.constant 0 : index
    %c0_66 = arith.constant 0 : index
    %120 = vector.load %arg3[%c4_64, %c0_65, %c0_66] : memref<8x8x2xf32, #tpu.memory_space<vmem>>, vector<1x8x2xf32>
    %121 = vector.shape_cast %120 : vector<1x8x2xf32> to vector<8x2xf32>
    %122 = vector.extract_strided_slice %90 {offsets = [4, 0], sizes = [1, 2], strides = [1, 1]} : vector<8x2xf32> to vector<1x2xf32>
    %123 = vector.broadcast %122 : vector<1x2xf32> to vector<8x2xf32>
    %124 = arith.mulf %123, %121 : vector<8x2xf32>
    %125 = arith.addf %118, %124 : vector<8x2xf32>
    %126 = vector.extract_strided_slice %121 {offsets = [4, 0], sizes = [1, 2], strides = [1, 1]} : vector<8x2xf32> to vector<1x2xf32>
    %c5_67 = arith.constant 5 : index
    %c0_68 = arith.constant 0 : index
    %c0_69 = arith.constant 0 : index
    %127 = vector.load %arg3[%c5_67, %c0_68, %c0_69] : memref<8x8x2xf32, #tpu.memory_space<vmem>>, vector<1x8x2xf32>
    %128 = vector.shape_cast %127 : vector<1x8x2xf32> to vector<8x2xf32>
    %129 = vector.extract_strided_slice %90 {offsets = [5, 0], sizes = [1, 2], strides = [1, 1]} : vector<8x2xf32> to vector<1x2xf32>
    %130 = vector.broadcast %129 : vector<1x2xf32> to vector<8x2xf32>
    %131 = arith.mulf %130, %128 : vector<8x2xf32>
    %132 = arith.addf %125, %131 : vector<8x2xf32>
    %133 = vector.extract_strided_slice %128 {offsets = [5, 0], sizes = [1, 2], strides = [1, 1]} : vector<8x2xf32> to vector<1x2xf32>
    %c6_70 = arith.constant 6 : index
    %c0_71 = arith.constant 0 : index
    %c0_72 = arith.constant 0 : index
    %134 = vector.load %arg3[%c6_70, %c0_71, %c0_72] : memref<8x8x2xf32, #tpu.memory_space<vmem>>, vector<1x8x2xf32>
    %135 = vector.shape_cast %134 : vector<1x8x2xf32> to vector<8x2xf32>
    %136 = vector.extract_strided_slice %90 {offsets = [6, 0], sizes = [1, 2], strides = [1, 1]} : vector<8x2xf32> to vector<1x2xf32>
    %137 = vector.broadcast %136 : vector<1x2xf32> to vector<8x2xf32>
    %138 = arith.mulf %137, %135 : vector<8x2xf32>
    %139 = arith.addf %132, %138 : vector<8x2xf32>
    %140 = vector.extract_strided_slice %135 {offsets = [6, 0], sizes = [1, 2], strides = [1, 1]} : vector<8x2xf32> to vector<1x2xf32>
    %c7_73 = arith.constant 7 : index
    %c0_74 = arith.constant 0 : index
    %c0_75 = arith.constant 0 : index
    %141 = vector.load %arg3[%c7_73, %c0_74, %c0_75] : memref<8x8x2xf32, #tpu.memory_space<vmem>>, vector<1x8x2xf32>
    %142 = vector.shape_cast %141 : vector<1x8x2xf32> to vector<8x2xf32>
    %143 = vector.extract_strided_slice %90 {offsets = [7, 0], sizes = [1, 2], strides = [1, 1]} : vector<8x2xf32> to vector<1x2xf32>
    %144 = vector.broadcast %143 : vector<1x2xf32> to vector<8x2xf32>
    %145 = arith.mulf %144, %142 : vector<8x2xf32>
    %146 = arith.addf %139, %145 : vector<8x2xf32>
    %147 = vector.extract_strided_slice %142 {offsets = [7, 0], sizes = [1, 2], strides = [1, 1]} : vector<8x2xf32> to vector<1x2xf32>
    %c0_76 = arith.constant 0 : index
    %c0_77 = arith.constant 0 : index
    %c0_78 = arith.constant 0 : index
    %148 = vector.load %arg2[%c0_76, %c0_77, %c0_78] : memref<8x32x2xf32, #tpu.memory_space<vmem>>, vector<1x32x2xf32>
    %149 = vector.shape_cast %148 : vector<1x32x2xf32> to vector<32x2xf32>
    %150 = vector.extract_strided_slice %146 {offsets = [0, 0], sizes = [1, 2], strides = [1, 1]} : vector<8x2xf32> to vector<1x2xf32>
    %151 = vector.broadcast %150 : vector<1x2xf32> to vector<32x2xf32>
    %152 = arith.mulf %149, %151 : vector<32x2xf32>
    %153 = arith.addf %0, %152 : vector<32x2xf32>
    %c1_79 = arith.constant 1 : index
    %c0_80 = arith.constant 0 : index
    %c0_81 = arith.constant 0 : index
    %154 = vector.load %arg2[%c1_79, %c0_80, %c0_81] : memref<8x32x2xf32, #tpu.memory_space<vmem>>, vector<1x32x2xf32>
    %155 = vector.shape_cast %154 : vector<1x32x2xf32> to vector<32x2xf32>
    %156 = vector.extract_strided_slice %146 {offsets = [1, 0], sizes = [1, 2], strides = [1, 1]} : vector<8x2xf32> to vector<1x2xf32>
    %157 = vector.broadcast %156 : vector<1x2xf32> to vector<32x2xf32>
    %158 = arith.mulf %155, %157 : vector<32x2xf32>
    %159 = arith.addf %153, %158 : vector<32x2xf32>
    %c2_82 = arith.constant 2 : index
    %c0_83 = arith.constant 0 : index
    %c0_84 = arith.constant 0 : index
    %160 = vector.load %arg2[%c2_82, %c0_83, %c0_84] : memref<8x32x2xf32, #tpu.memory_space<vmem>>, vector<1x32x2xf32>
    %161 = vector.shape_cast %160 : vector<1x32x2xf32> to vector<32x2xf32>
    %162 = vector.extract_strided_slice %146 {offsets = [2, 0], sizes = [1, 2], strides = [1, 1]} : vector<8x2xf32> to vector<1x2xf32>
    %163 = vector.broadcast %162 : vector<1x2xf32> to vector<32x2xf32>
    %164 = arith.mulf %161, %163 : vector<32x2xf32>
    %165 = arith.addf %159, %164 : vector<32x2xf32>
    %c3_85 = arith.constant 3 : index
    %c0_86 = arith.constant 0 : index
    %c0_87 = arith.constant 0 : index
    %166 = vector.load %arg2[%c3_85, %c0_86, %c0_87] : memref<8x32x2xf32, #tpu.memory_space<vmem>>, vector<1x32x2xf32>
    %167 = vector.shape_cast %166 : vector<1x32x2xf32> to vector<32x2xf32>
    %168 = vector.extract_strided_slice %146 {offsets = [3, 0], sizes = [1, 2], strides = [1, 1]} : vector<8x2xf32> to vector<1x2xf32>
    %169 = vector.broadcast %168 : vector<1x2xf32> to vector<32x2xf32>
    %170 = arith.mulf %167, %169 : vector<32x2xf32>
    %171 = arith.addf %165, %170 : vector<32x2xf32>
    %c4_88 = arith.constant 4 : index
    %c0_89 = arith.constant 0 : index
    %c0_90 = arith.constant 0 : index
    %172 = vector.load %arg2[%c4_88, %c0_89, %c0_90] : memref<8x32x2xf32, #tpu.memory_space<vmem>>, vector<1x32x2xf32>
    %173 = vector.shape_cast %172 : vector<1x32x2xf32> to vector<32x2xf32>
    %174 = vector.extract_strided_slice %146 {offsets = [4, 0], sizes = [1, 2], strides = [1, 1]} : vector<8x2xf32> to vector<1x2xf32>
    %175 = vector.broadcast %174 : vector<1x2xf32> to vector<32x2xf32>
    %176 = arith.mulf %173, %175 : vector<32x2xf32>
    %177 = arith.addf %171, %176 : vector<32x2xf32>
    %c5_91 = arith.constant 5 : index
    %c0_92 = arith.constant 0 : index
    %c0_93 = arith.constant 0 : index
    %178 = vector.load %arg2[%c5_91, %c0_92, %c0_93] : memref<8x32x2xf32, #tpu.memory_space<vmem>>, vector<1x32x2xf32>
    %179 = vector.shape_cast %178 : vector<1x32x2xf32> to vector<32x2xf32>
    %180 = vector.extract_strided_slice %146 {offsets = [5, 0], sizes = [1, 2], strides = [1, 1]} : vector<8x2xf32> to vector<1x2xf32>
    %181 = vector.broadcast %180 : vector<1x2xf32> to vector<32x2xf32>
    %182 = arith.mulf %179, %181 : vector<32x2xf32>
    %183 = arith.addf %177, %182 : vector<32x2xf32>
    %c6_94 = arith.constant 6 : index
    %c0_95 = arith.constant 0 : index
    %c0_96 = arith.constant 0 : index
    %184 = vector.load %arg2[%c6_94, %c0_95, %c0_96] : memref<8x32x2xf32, #tpu.memory_space<vmem>>, vector<1x32x2xf32>
    %185 = vector.shape_cast %184 : vector<1x32x2xf32> to vector<32x2xf32>
    %186 = vector.extract_strided_slice %146 {offsets = [6, 0], sizes = [1, 2], strides = [1, 1]} : vector<8x2xf32> to vector<1x2xf32>
    %187 = vector.broadcast %186 : vector<1x2xf32> to vector<32x2xf32>
    %188 = arith.mulf %185, %187 : vector<32x2xf32>
    %189 = arith.addf %183, %188 : vector<32x2xf32>
    %c7_97 = arith.constant 7 : index
    %c0_98 = arith.constant 0 : index
    %c0_99 = arith.constant 0 : index
    %190 = vector.load %arg2[%c7_97, %c0_98, %c0_99] : memref<8x32x2xf32, #tpu.memory_space<vmem>>, vector<1x32x2xf32>
    %191 = vector.shape_cast %190 : vector<1x32x2xf32> to vector<32x2xf32>
    %192 = vector.extract_strided_slice %146 {offsets = [7, 0], sizes = [1, 2], strides = [1, 1]} : vector<8x2xf32> to vector<1x2xf32>
    %193 = vector.broadcast %192 : vector<1x2xf32> to vector<32x2xf32>
    %194 = arith.mulf %191, %193 : vector<32x2xf32>
    %195 = arith.addf %189, %194 : vector<32x2xf32>
    %c0_100 = arith.constant 0 : index
    %c0_101 = arith.constant 0 : index
    %196 = vector.load %arg6[%c0_100, %c0_101] : memref<32x2xf32, #tpu.memory_space<vmem>>, vector<32x2xf32>
    tpu.vector_store %arg6[%c0_100, %c0_101], %195 {strides = array<i32>} : memref<32x2xf32, #tpu.memory_space<vmem>>, vector<32x2xf32>,
    %197 = tpu.concatenate %98, %105, %112, %119, %126, %133, %140, %147 in 0 : vector<1x2xf32>, vector<1x2xf32>, vector<1x2xf32>, vector<1x2xf32>, vector<1x2xf32>, vector<1x2xf32>, vector<1x2xf32>, vector<1x2xf32> -> vector<8x2xf32>
    %198 = tpu.concatenate %12, %23, %34, %45, %56, %67, %78, %89 in 0 : vector<1x2xf32>, vector<1x2xf32>, vector<1x2xf32>, vector<1x2xf32>, vector<1x2xf32>, vector<1x2xf32>, vector<1x2xf32>, vector<1x2xf32> -> vector<8x2xf32>
    %199 = arith.mulf %197, %198 : vector<8x2xf32>
    %200 = arith.mulf %90, %90 : vector<8x2xf32>
    %cst_102 = arith.constant 1.000000e+00 : f32
    %201 = vector.broadcast %cst_102 : f32 to vector<8x2xf32>
    %202 = arith.subf %201, %200 : vector<8x2xf32>
    %203 = arith.mulf %202, %199 : vector<8x2xf32>
    %cst_103 = arith.constant 1.000000e+00 : f32
    %204 = vector.broadcast %cst_103 : f32 to vector<8x2xf32>
    %205 = arith.addf %203, %204 : vector<8x2xf32>
    %206 = math.absf %205 : vector<8x2xf32>
    %207 = math.log %206 : vector<8x2xf32>
    %cst_104 = arith.constant dense<0.000000e+00> : vector<2xf32>
    %208 = vector.multi_reduction <add>, %207, %cst_104 [0] : vector<8x2xf32> to vector<2xf32>
    %209 = vector.shape_cast %208 : vector<2xf32> to vector<1x2xf32>
    %c0_105 = arith.constant 0 : index
    %c0_106 = arith.constant 0 : index
    %210 = vector.load %arg7[%c0_105, %c0_106] : memref<1x2xf32, #tpu.memory_space<vmem>>, vector<1x2xf32>
    tpu.vector_store %arg7[%c0_105, %c0_106], %209 {strides = array<i32>} : memref<1x2xf32, #tpu.memory_space<vmem>>, vector<1x2xf32>,
    return
  }
  func.func @transform_0(%arg0: i32) -> (i32, i32) {
    %c0_i32 = arith.constant 0 : i32
    %c0_i32_0 = arith.constant 0 : i32
    return %c0_i32, %arg0 : i32, i32
  }
  func.func @transform_1(%arg0: i32) -> (i32, i32, i32) {
    %c0_i32 = arith.constant 0 : i32
    %c0_i32_0 = arith.constant 0 : i32
    %c0_i32_1 = arith.constant 0 : i32
    return %c0_i32, %c0_i32_0, %arg0 : i32, i32, i32
  }
  func.func @transform_2(%arg0: i32) -> (i32, i32, i32) {
    %c0_i32 = arith.constant 0 : i32
    %c0_i32_0 = arith.constant 0 : i32
    %c0_i32_1 = arith.constant 0 : i32
    return %c0_i32, %c0_i32_0, %arg0 : i32, i32, i32
  }
  func.func @transform_3(%arg0: i32) -> (i32, i32, i32) {
    %c0_i32 = arith.constant 0 : i32
    %c0_i32_0 = arith.constant 0 : i32
    %c0_i32_1 = arith.constant 0 : i32
    return %c0_i32, %c0_i32_0, %arg0 : i32, i32, i32
  }
  func.func @transform_4(%arg0: i32) -> (i32, i32) {
    %c0_i32 = arith.constant 0 : i32
    %c0_i32_0 = arith.constant 0 : i32
    return %c0_i32, %arg0 : i32, i32
  }
  func.func @transform_5(%arg0: i32) -> (i32, i32) {
    %c0_i32 = arith.constant 0 : i32
    %c0_i32_0 = arith.constant 0 : i32
    return %c0_i32, %arg0 : i32, i32
  }
  func.func @transform_6(%arg0: i32) -> (i32, i32) {
    %c0_i32 = arith.constant 0 : i32
    %c0_i32_0 = arith.constant 0 : i32
    return %c0_i32, %arg0 : i32, i32
  }
}

</mosaic_0001>

<llo_original>
// kernel: tpu_custom_call.1
$region0: #{tpu_custom_call.1}
  #allocation0 [shape = 'u32[]', space=smem, size = 0x4, offset = 0x4, fixed_abs, tag = 'smem constant byte address 0x4 - core index']
  #allocation1 [shape = 'u32[144,128]{1,0:T(1,128)}', space=vmem, size = 0x12000, scoped, tag = 'internal scratch']
  %s0 = inlined_call_operand.vmem [shape: f32[32,2], index: 0, kind: input, shape index: {}]
  %s1 = inlined_call_operand.vmem [shape: f32[8,32,2], index: 1, kind: input, shape index: {}]
  %s2 = inlined_call_operand.vmem [shape: f32[8,8,2], index: 2, kind: input, shape index: {}]
  %s3 = inlined_call_operand.vmem [shape: f32[8,8,2], index: 3, kind: input, shape index: {}]
  %s4 = inlined_call_operand.vmem [shape: f32[8,2], index: 4, kind: input, shape index: {}]
  %s5 = inlined_call_operand.vmem [shape: f32[32,2], index: 5, kind: output, shape index: {0}]
  %s6 = inlined_call_operand.hbm [shape: f32[1,2], index: 6, kind: output, shape index: {1}]
  %7 = xla_tuple %s5, %s6
  %s8 = sld [smem:[#allocation0]]
  $region38: #{tpu_custom_call.1} parent=0
    _
  %s10 = ssub.s32 1, %s8
  %s11 = scalar_select 0, %s10, %s8
  $region1: #{tpu_custom_call.1} parent=0
    #allocation2 [shape = 'u8[512]{0}', space=vmem, size = 0x400, scoped, tag = 'output window, operand 1, single buffered']
    #allocation3 [shape = 's32[1]{0}', space=sflag, size = 0x4, scoped, tag = 'scoped memory for tpu_custom_call.1']
    %12 = vsyncpa [#allocation3], 0
    // Predicated region
    $region2: #{tpu_custom_call.1} parent=1 // pred_check
      _
    $region3: #{tpu_custom_call.1} parent=1 // pred_check_branch
      %14 = sbr.rel (0) target = $region5
    $region4: #{tpu_custom_call.1} parent=1 // pred_region
      _
    $region5: #{tpu_custom_call.1} parent=1 // pred_fallthru
      _
    // Predicated region
    $region6: #{tpu_custom_call.1} parent=1 // pred_check
      _
    $region7: #{tpu_custom_call.1} parent=1 // pred_check_branch
      %16 = sbr.rel (0) target = $region9
    $region8: #{tpu_custom_call.1} parent=1 // pred_region
      _
    $region9: #{tpu_custom_call.1} parent=1 // pred_fallthru
      _
    // Predicated region
    $region10: #{tpu_custom_call.1} parent=1 // pred_check
      _
    $region11: #{tpu_custom_call.1} parent=1 // pred_check_branch
      %18 = sbr.rel (0) target = $region13
    $region12: #{tpu_custom_call.1} parent=1 // pred_region
      _
    $region13: #{tpu_custom_call.1} parent=1 // pred_fallthru
      _
    // Predicated region
    $region14: #{tpu_custom_call.1} parent=1 // pred_check
      _
    $region15: #{tpu_custom_call.1} parent=1 // pred_check_branch
      %20 = sbr.rel (0) target = $region17
    $region16: #{tpu_custom_call.1} parent=1 // pred_region
      _
    $region17: #{tpu_custom_call.1} parent=1 // pred_fallthru
      _
    // Predicated region
    $region18: #{tpu_custom_call.1} parent=1 // pred_check
      _
    $region19: #{tpu_custom_call.1} parent=1 // pred_check_branch
      %22 = sbr.rel (0) target = $region21
    $region20: #{tpu_custom_call.1} parent=1 // pred_region
      _
    $region21: #{tpu_custom_call.1} parent=1 // pred_fallthru
      _
    %v23 = vld [vmem:[%s0] sm:$0xff]
    %v24 = vld [vmem:[%s0 + $0x8] sm:$0xff]
    %v25 = vld [vmem:[%s0 + $0x10] sm:$0xff]
    %v26 = vld [vmem:[%s0 + $0x18] sm:$0xff]
    %v27 = vld [vmem:[%s4] sm:$0xff]
    %v28 = vld [vmem:[%s1] sm:$0xff]
    %v29 = vld [vmem:[%s1 + $0x8] sm:$0xff]
    %v30 = vld [vmem:[%s1 + $0x10] sm:$0xff]
    %v31 = vld [vmem:[%s1 + $0x18] sm:$0xff]
    %v32 = vmul.f32 %v23, %v28
    %v33 = vmul.f32 %v24, %v29
    %v34 = vmul.f32 %v25, %v30
    %v35 = vmul.f32 %v26, %v31
    %vm36 = vcmask 15360
    %v37 = vsel %vm36, %v32, 0.0
    %v38 = vsel %vm36, %v33, 0.0
    %v39 = vadd.f32 %v37, %v38
    %v40 = vsel %vm36, %v34, 0.0
    %v41 = vadd.f32 %v39, %v40
    %v42 = vsel %vm36, %v35, 0.0
    %v43 = vadd.f32 %v41, %v42
    %v44 = vrot.slane %v43, 4
    %v45 = vadd.f32 %v43, %v44
    %v46 = vrot.slane %v45, 2
    %v47 = vadd.f32 %v45, %v46
    %v48 = vrot.slane %v47, 1
    %v49 = vadd.f32 %v47, %v48
    %v50 = vld [vmem:[%s3] sm:$0xff]
    %v51 = vmul.f32 %v49, %v50
    %v52 = vadd.f32 %v27, %v51
    %s53 = scalar_lea.vmem %s1, 32
    %v54 = vld [vmem:[%s53] sm:$0xff]
    %v55 = vld [vmem:[%s53 + $0x8] sm:$0xff]
    %v56 = vld [vmem:[%s53 + $0x10] sm:$0xff]
    %v57 = vld [vmem:[%s53 + $0x18] sm:$0xff]
    %v58 = vmul.f32 %v23, %v54
    %v59 = vmul.f32 %v24, %v55
    %v60 = vmul.f32 %v25, %v56
    %v61 = vmul.f32 %v26, %v57
    %v62 = vsel %vm36, %v58, 0.0
    %v63 = vsel %vm36, %v59, 0.0
    %v64 = vadd.f32 %v62, %v63
    %v65 = vsel %vm36, %v60, 0.0
    %v66 = vadd.f32 %v64, %v65
    %v67 = vsel %vm36, %v61, 0.0
    %v68 = vadd.f32 %v66, %v67
    %v69 = vrot.slane %v68, 4
    %v70 = vadd.f32 %v68, %v69
    %v71 = vrot.slane %v70, 2
    %v72 = vadd.f32 %v70, %v71
    %v73 = vrot.slane %v72, 1
    %v74 = vadd.f32 %v72, %v73
    %s75 = scalar_lea.vmem %s3, 8
    %v76 = vld [vmem:[%s75] sm:$0xff]
    %v77 = vmul.f32 %v74, %v76
    %v78 = vadd.f32 %v52, %v77
    %s79 = scalar_lea.vmem %s1, 64
    %v80 = vld [vmem:[%s79] sm:$0xff]
    %v81 = vld [vmem:[%s79 + $0x8] sm:$0xff]
    %v82 = vld [vmem:[%s79 + $0x10] sm:$0xff]
    %v83 = vld [vmem:[%s79 + $0x18] sm:$0xff]
    %v84 = vmul.f32 %v23, %v80
    %v85 = vmul.f32 %v24, %v81
    %v86 = vmul.f32 %v25, %v82
    %v87 = vmul.f32 %v26, %v83
    %v88 = vsel %vm36, %v84, 0.0
    %v89 = vsel %vm36, %v85, 0.0
    %v90 = vadd.f32 %v88, %v89
    %v91 = vsel %vm36, %v86, 0.0
    %v92 = vadd.f32 %v90, %v91
    %v93 = vsel %vm36, %v87, 0.0
    %v94 = vadd.f32 %v92, %v93
    %v95 = vrot.slane %v94, 4
    %v96 = vadd.f32 %v94, %v95
    %v97 = vrot.slane %v96, 2
    %v98 = vadd.f32 %v96, %v97
    %v99 = vrot.slane %v98, 1
    %v100 = vadd.f32 %v98, %v99
    %s101 = scalar_lea.vmem %s3, 16
    %v102 = vld [vmem:[%s101] sm:$0xff]
    %v103 = vmul.f32 %v100, %v102
    %v104 = vadd.f32 %v78, %v103
    %s105 = scalar_lea.vmem %s1, 96
    %v106 = vld [vmem:[%s105] sm:$0xff]
    %v107 = vld [vmem:[%s105 + $0x8] sm:$0xff]
    %v108 = vld [vmem:[%s105 + $0x10] sm:$0xff]
    %v109 = vld [vmem:[%s105 + $0x18] sm:$0xff]
    %v110 = vmul.f32 %v23, %v106
    %v111 = vmul.f32 %v24, %v107
    %v112 = vmul.f32 %v25, %v108
    %v113 = vmul.f32 %v26, %v109
    %v114 = vsel %vm36, %v110, 0.0
    %v115 = vsel %vm36, %v111, 0.0
    %v116 = vadd.f32 %v114, %v115
    %v117 = vsel %vm36, %v112, 0.0
    %v118 = vadd.f32 %v116, %v117
    %v119 = vsel %vm36, %v113, 0.0
    %v120 = vadd.f32 %v118, %v119
    %v121 = vrot.slane %v120, 4
    %v122 = vadd.f32 %v120, %v121
    %v123 = vrot.slane %v122, 2
    %v124 = vadd.f32 %v122, %v123
    %v125 = vrot.slane %v124, 1
    %v126 = vadd.f32 %v124, %v125
    %s127 = scalar_lea.vmem %s3, 24
    %v128 = vld [vmem:[%s127] sm:$0xff]
    %v129 = vmul.f32 %v126, %v128
    %v130 = vadd.f32 %v104, %v129
    %s131 = scalar_lea.vmem %s1, 128
    %v132 = vld [vmem:[%s131] sm:$0xff]
    %v133 = vld [vmem:[%s131 + $0x8] sm:$0xff]
    %v134 = vld [vmem:[%s131 + $0x10] sm:$0xff]
    %v135 = vld [vmem:[%s131 + $0x18] sm:$0xff]
    %v136 = vmul.f32 %v23, %v132
    %v137 = vmul.f32 %v24, %v133
    %v138 = vmul.f32 %v25, %v134
    %v139 = vmul.f32 %v26, %v135
    %v140 = vsel %vm36, %v136, 0.0
    %v141 = vsel %vm36, %v137, 0.0
    %v142 = vadd.f32 %v140, %v141
    %v143 = vsel %vm36, %v138, 0.0
    %v144 = vadd.f32 %v142, %v143
    %v145 = vsel %vm36, %v139, 0.0
    %v146 = vadd.f32 %v144, %v145
    %v147 = vrot.slane %v146, 4
    %v148 = vadd.f32 %v146, %v147
    %v149 = vrot.slane %v148, 2
    %v150 = vadd.f32 %v148, %v149
    %v151 = vrot.slane %v150, 1
    %v152 = vadd.f32 %v150, %v151
    %s153 = scalar_lea.vmem %s3, 32
    %v154 = vld [vmem:[%s153] sm:$0xff]
    %v155 = vmul.f32 %v152, %v154
    %v156 = vadd.f32 %v130, %v155
    %s157 = scalar_lea.vmem %s1, 160
    %v158 = vld [vmem:[%s157] sm:$0xff]
    %v159 = vld [vmem:[%s157 + $0x8] sm:$0xff]
    %v160 = vld [vmem:[%s157 + $0x10] sm:$0xff]
    %v161 = vld [vmem:[%s157 + $0x18] sm:$0xff]
    %v162 = vmul.f32 %v23, %v158
    %v163 = vmul.f32 %v24, %v159
    %v164 = vmul.f32 %v25, %v160
    %v165 = vmul.f32 %v26, %v161
    %v166 = vsel %vm36, %v162, 0.0
    %v167 = vsel %vm36, %v163, 0.0
    %v168 = vadd.f32 %v166, %v167
    %v169 = vsel %vm36, %v164, 0.0
    %v170 = vadd.f32 %v168, %v169
    %v171 = vsel %vm36, %v165, 0.0
    %v172 = vadd.f32 %v170, %v171
    %v173 = vrot.slane %v172, 4
    %v174 = vadd.f32 %v172, %v173
    %v175 = vrot.slane %v174, 2
    %v176 = vadd.f32 %v174, %v175
    %v177 = vrot.slane %v176, 1
    %v178 = vadd.f32 %v176, %v177
    %s179 = scalar_lea.vmem %s3, 40
    %v180 = vld [vmem:[%s179] sm:$0xff]
    %v181 = vmul.f32 %v178, %v180
    %v182 = vadd.f32 %v156, %v181
    %s183 = scalar_lea.vmem %s1, 192
    %v184 = vld [vmem:[%s183] sm:$0xff]
    %v185 = vld [vmem:[%s183 + $0x8] sm:$0xff]
    %v186 = vld [vmem:[%s183 + $0x10] sm:$0xff]
    %v187 = vld [vmem:[%s183 + $0x18] sm:$0xff]
    %v188 = vmul.f32 %v23, %v184
    %v189 = vmul.f32 %v24, %v185
    %v190 = vmul.f32 %v25, %v186
    %v191 = vmul.f32 %v26, %v187
    %v192 = vsel %vm36, %v188, 0.0
    %v193 = vsel %vm36, %v189, 0.0
    %v194 = vadd.f32 %v192, %v193
    %v195 = vsel %vm36, %v190, 0.0
    %v196 = vadd.f32 %v194, %v195
    %v197 = vsel %vm36, %v191, 0.0
    %v198 = vadd.f32 %v196, %v197
    %v199 = vrot.slane %v198, 4
    %v200 = vadd.f32 %v198, %v199
    %v201 = vrot.slane %v200, 2
    %v202 = vadd.f32 %v200, %v201
    %v203 = vrot.slane %v202, 1
    %v204 = vadd.f32 %v202, %v203
    %s205 = scalar_lea.vmem %s3, 48
    %v206 = vld [vmem:[%s205] sm:$0xff]
    %v207 = vmul.f32 %v204, %v206
    %v208 = vadd.f32 %v182, %v207
    %s209 = scalar_lea.vmem %s1, 224
    %v210 = vld [vmem:[%s209] sm:$0xff]
    %v211 = vld [vmem:[%s209 + $0x8] sm:$0xff]
    %v212 = vld [vmem:[%s209 + $0x10] sm:$0xff]
    %v213 = vld [vmem:[%s209 + $0x18] sm:$0xff]
    %v214 = vmul.f32 %v23, %v210
    %v215 = vmul.f32 %v24, %v211
    %v216 = vmul.f32 %v25, %v212
    %v217 = vmul.f32 %v26, %v213
    %v218 = vsel %vm36, %v214, 0.0
    %v219 = vsel %vm36, %v215, 0.0
    %v220 = vadd.f32 %v218, %v219
    %v221 = vsel %vm36, %v216, 0.0
    %v222 = vadd.f32 %v220, %v221
    %v223 = vsel %vm36, %v217, 0.0
    %v224 = vadd.f32 %v222, %v223
    %v225 = vrot.slane %v224, 4
    %v226 = vadd.f32 %v224, %v225
    %v227 = vrot.slane %v226, 2
    %v228 = vadd.f32 %v226, %v227
    %v229 = vrot.slane %v228, 1
    %v230 = vadd.f32 %v228, %v229
    %s231 = scalar_lea.vmem %s3, 56
    %v232 = vld [vmem:[%s231] sm:$0xff]
    %v233 = vmul.f32 %v230, %v232
    %v234 = vadd.f32 %v208, %v233
    %v235 = vtanh.pop %v234
    %v236 = vld [vmem:[%s2] sm:$0xff]
    %v237 = vlaneseq
    %v238 = vshrl.u32 %v237, 7
    %v239 = vsub.s32 0, %v238
    %v240 = vrot.slane %v235, %v239
    %v241 = vmul.f32 %v240, %v236
    %v242 = vadd.f32 %v241, 0.0
    %s243 = scalar_lea.vmem %s2, 8
    %v244 = vld [vmem:[%s243] sm:$0xff]
    %v245 = vlaneseq
    %v246 = vshrl.u32 %v245, 7
    %v247 = vsub.s32 1, %v246
    %v248 = vrot.slane %v235, %v247
    %v249 = vmul.f32 %v248, %v244
    %v250 = vadd.f32 %v242, %v249
    %s251 = scalar_lea.vmem %s2, 16
    %v252 = vld [vmem:[%s251] sm:$0xff]
    %v253 = vlaneseq
    %v254 = vshrl.u32 %v253, 7
    %v255 = vsub.s32 2, %v254
    %v256 = vrot.slane %v235, %v255
    %v257 = vmul.f32 %v256, %v252
    %v258 = vadd.f32 %v250, %v257
    %s259 = scalar_lea.vmem %s2, 24
    %v260 = vld [vmem:[%s259] sm:$0xff]
    %v261 = vlaneseq
    %v262 = vshrl.u32 %v261, 7
    %v263 = vsub.s32 3, %v262
    %v264 = vrot.slane %v235, %v263
    %v265 = vmul.f32 %v264, %v260
    %v266 = vadd.f32 %v258, %v265
    %s267 = scalar_lea.vmem %s2, 32
    %v268 = vld [vmem:[%s267] sm:$0xff]
    %v269 = vlaneseq
    %v270 = vshrl.u32 %v269, 7
    %v271 = vsub.s32 4, %v270
    %v272 = vrot.slane %v235, %v271
    %v273 = vmul.f32 %v272, %v268
    %v274 = vadd.f32 %v266, %v273
    %s275 = scalar_lea.vmem %s2, 40
    %v276 = vld [vmem:[%s275] sm:$0xff]
    %v277 = vlaneseq
    %v278 = vshrl.u32 %v277, 7
    %v279 = vsub.s32 5, %v278
    %v280 = vrot.slane %v235, %v279
    %v281 = vmul.f32 %v280, %v276
    %v282 = vadd.f32 %v274, %v281
    %s283 = scalar_lea.vmem %s2, 48
    %v284 = vld [vmem:[%s283] sm:$0xff]
    %v285 = vlaneseq
    %v286 = vshrl.u32 %v285, 7
    %v287 = vsub.s32 6, %v286
    %v288 = vrot.slane %v235, %v287
    %v289 = vmul.f32 %v288, %v284
    %v290 = vadd.f32 %v282, %v289
    %s291 = scalar_lea.vmem %s2, 56
    %v292 = vld [vmem:[%s291] sm:$0xff]
    %v293 = vlaneseq
    %v294 = vshrl.u32 %v293, 7
    %v295 = vsub.s32 7, %v294
    %v296 = vrot.slane %v235, %v295
    %v297 = vmul.f32 %v296, %v292
    %v298 = vadd.f32 %v290, %v297
    %v299 = vlaneseq
    %v300 = vshrl.u32 %v299, 7
    %v301 = vsub.s32 0, %v300
    %v302 = vrot.slane %v298, %v301
    %v303 = vmul.f32 %v28, %v302
    %v304 = vmul.f32 %v29, %v302
    %v305 = vmul.f32 %v30, %v302
    %v306 = vmul.f32 %v31, %v302
    %v307 = vadd.f32 %v23, %v303
    %v308 = vadd.f32 %v24, %v304
    %v309 = vadd.f32 %v25, %v305
    %v310 = vadd.f32 %v26, %v306
    %v311 = vlaneseq
    %v312 = vshrl.u32 %v311, 7
    %v313 = vsub.s32 1, %v312
    %v314 = vrot.slane %v298, %v313
    %v315 = vmul.f32 %v54, %v314
    %v316 = vmul.f32 %v55, %v314
    %v317 = vmul.f32 %v56, %v314
    %v318 = vmul.f32 %v57, %v314
    %v319 = vadd.f32 %v307, %v315
    %v320 = vadd.f32 %v308, %v316
    %v321 = vadd.f32 %v309, %v317
    %v322 = vadd.f32 %v310, %v318
    %v323 = vlaneseq
    %v324 = vshrl.u32 %v323, 7
    %v325 = vsub.s32 2, %v324
    %v326 = vrot.slane %v298, %v325
    %v327 = vmul.f32 %v80, %v326
    %v328 = vmul.f32 %v81, %v326
    %v329 = vmul.f32 %v82, %v326
    %v330 = vmul.f32 %v83, %v326
    %v331 = vadd.f32 %v319, %v327
    %v332 = vadd.f32 %v320, %v328
    %v333 = vadd.f32 %v321, %v329
    %v334 = vadd.f32 %v322, %v330
    %v335 = vlaneseq
    %v336 = vshrl.u32 %v335, 7
    %v337 = vsub.s32 3, %v336
    %v338 = vrot.slane %v298, %v337
    %v339 = vmul.f32 %v106, %v338
    %v340 = vmul.f32 %v107, %v338
    %v341 = vmul.f32 %v108, %v338
    %v342 = vmul.f32 %v109, %v338
    %v343 = vadd.f32 %v331, %v339
    %v344 = vadd.f32 %v332, %v340
    %v345 = vadd.f32 %v333, %v341
    %v346 = vadd.f32 %v334, %v342
    %v347 = vlaneseq
    %v348 = vshrl.u32 %v347, 7
    %v349 = vsub.s32 4, %v348
    %v350 = vrot.slane %v298, %v349
    %v351 = vmul.f32 %v132, %v350
    %v352 = vmul.f32 %v133, %v350
    %v353 = vmul.f32 %v134, %v350
    %v354 = vmul.f32 %v135, %v350
    %v355 = vadd.f32 %v343, %v351
    %v356 = vadd.f32 %v344, %v352
    %v357 = vadd.f32 %v345, %v353
    %v358 = vadd.f32 %v346, %v354
    %v359 = vlaneseq
    %v360 = vshrl.u32 %v359, 7
    %v361 = vsub.s32 5, %v360
    %v362 = vrot.slane %v298, %v361
    %v363 = vmul.f32 %v158, %v362
    %v364 = vmul.f32 %v159, %v362
    %v365 = vmul.f32 %v160, %v362
    %v366 = vmul.f32 %v161, %v362
    %v367 = vadd.f32 %v355, %v363
    %v368 = vadd.f32 %v356, %v364
    %v369 = vadd.f32 %v357, %v365
    %v370 = vadd.f32 %v358, %v366
    %v371 = vlaneseq
    %v372 = vshrl.u32 %v371, 7
    %v373 = vsub.s32 6, %v372
    %v374 = vrot.slane %v298, %v373
    %v375 = vmul.f32 %v184, %v374
    %v376 = vmul.f32 %v185, %v374
    %v377 = vmul.f32 %v186, %v374
    %v378 = vmul.f32 %v187, %v374
    %v379 = vadd.f32 %v367, %v375
    %v380 = vadd.f32 %v368, %v376
    %v381 = vadd.f32 %v369, %v377
    %v382 = vadd.f32 %v370, %v378
    %v383 = vlaneseq
    %v384 = vshrl.u32 %v383, 7
    %v385 = vsub.s32 7, %v384
    %v386 = vrot.slane %v298, %v385
    %v387 = vmul.f32 %v210, %v386
    %v388 = vmul.f32 %v211, %v386
    %v389 = vmul.f32 %v212, %v386
    %v390 = vmul.f32 %v213, %v386
    %v391 = vadd.f32 %v379, %v387
    %v392 = vadd.f32 %v380, %v388
    %v393 = vadd.f32 %v381, %v389
    %v394 = vadd.f32 %v382, %v390
    %395 = vst.msk [vmem:[%s5] sm:$0xff] %vm36, %v391
    %396 = vst.msk [vmem:[%s5 + $0x8] sm:$0xff] %vm36, %v392
    %397 = vst.msk [vmem:[%s5 + $0x10] sm:$0xff] %vm36, %v393
    %398 = vst.msk [vmem:[%s5 + $0x18] sm:$0xff] %vm36, %v394
    %vm399 = vcmask 1040384
    %v400 = vsel %vm399, %v236, %v244
    %vm401 = vcmask 1041408
    %v402 = vsel %vm401, %v400, %v252
    %vm403 = vcmask 1042432
    %v404 = vsel %vm403, %v402, %v260
    %vm405 = vcmask 1043456
    %v406 = vsel %vm405, %v404, %v268
    %vm407 = vcmask 1044480
    %v408 = vsel %vm407, %v406, %v276
    %vm409 = vcmask 1045504
    %v410 = vsel %vm409, %v408, %v284
    %vm411 = vcmask 1046528
    %v412 = vsel %vm411, %v410, %v292
    %v413 = vsel %vm399, %v50, %v76
    %v414 = vsel %vm401, %v413, %v102
    %v415 = vsel %vm403, %v414, %v128
    %v416 = vsel %vm405, %v415, %v154
    %v417 = vsel %vm407, %v416, %v180
    %v418 = vsel %vm409, %v417, %v206
    %v419 = vsel %vm411, %v418, %v232
    %v420 = vmul.f32 %v412, %v419
    %v421 = vmul.f32 %v235, %v235
    %v422 = vsub.f32 1.0, %v421
    %v423 = vmul.f32 %v422, %v420
    %v424 = vadd.f32 %v423, 1.0
    %v425 = vand.u32 2147483647, %v424
    %v426 = vlog2.pop %v425
    %v427 = vmul.f32 %v426, 0.6931472
    %v428 = vsel %vm36, %v427, 0.0
    %v429 = vrot.slane %v428, 4
    %v430 = vadd.f32 %v428, %v429
    %v431 = vrot.slane %v430, 2
    %v432 = vadd.f32 %v430, %v431
    %v433 = vrot.slane %v432, 1
    %v434 = vadd.f32 %v432, %v433
    %vm435 = vcmask 8192
    %436 = vst.msk [vmem:[#allocation2] sm:$0x1] %vm435, %v434
    // Predicated region
    $region22: #{tpu_custom_call.1} parent=1 // pred_check
      _
    $region23: #{tpu_custom_call.1} parent=1 // pred_check_branch
      %438 = sbr.rel (0) target = $region25
    $region24: #{tpu_custom_call.1} parent=1 // pred_region
      _
    $region25: #{tpu_custom_call.1} parent=1 // pred_fallthru
      _
    // Predicated region
    $region26: #{tpu_custom_call.1} parent=1 // pred_check
      _
    $region27: #{tpu_custom_call.1} parent=1 // pred_check_branch
      %440 = sbr.rel (0) target = $region29
    $region28: #{tpu_custom_call.1} parent=1 // pred_region
      %s442 = ssub.s32 16, 16
      %443 = vsyncadd [#allocation3], %s442
      %s445 = sshll.u32 [#allocation2], 4
      %s446 = int_to_ptr.vmem [resolvable:$true] %s445
      %448 = dma.vmem_to_hbm [thread:$0]  %s446, 16, %s6, [#allocation3]
    $region29: #{tpu_custom_call.1} parent=1 // pred_fallthru
      _
    // Predicated region
    $region30: #{tpu_custom_call.1} parent=1 // pred_check
      _
    $region31: #{tpu_custom_call.1} parent=1 // pred_check_branch
      %450 = sbr.rel (0) target = $region33
    $region32: #{tpu_custom_call.1} parent=1 // pred_region
      _
    $region33: #{tpu_custom_call.1} parent=1 // pred_fallthru
      _
    // Predicated region
    $region34: #{tpu_custom_call.1} parent=1 // pred_check
      _
    $region35: #{tpu_custom_call.1} parent=1 // pred_check_branch
      %452 = sbr.rel (0) target = $region37
    $region36: #{tpu_custom_call.1} parent=1 // pred_region
      %453 = dma.done [#allocation3], 16
    $region37: #{tpu_custom_call.1} parent=1 // pred_fallthru
      _
    %454 = vsyncpa [#allocation3], 1

</llo_original>
